<compile_context>
chip_gen: v7x
topology: tpu7x:2x2x1
jax: 0.10.0
libtpu: 0.0.40
codegen_flags: <defaults>
</compile_context>

<pallas_src>
import functools

import jax
import jax.numpy as jnp
from jax import lax
from jax.experimental import pallas as pl
from jax.experimental.pallas import tpu as pltpu

# ---------------------------------------------------------------------------
# Model hyper-parameters (small, consistent with the module's __init__)
# ---------------------------------------------------------------------------
K_HOP = 2
NUM_EMBED = 64      # number of graph nodes / embedding rows (V)
EMBED_SIZE = 32     # embedding dim (D)
OUT_FEATURES = 32   # must equal EMBED_SIZE so matmul(features[i], weight/bias) is valid
IN_FEATURES = 16
N_INPUTS = 16       # == IN_FEATURES so torch's sum(features) broadcast is legal
N_CAND0 = 8         # initial candidate list length

V_PAD = 128         # lane-pad the V (contraction) axis
D_PAD = 128         # lane-pad the feature axis (D / OUT / IN all live in 0..127)


# ---------------------------------------------------------------------------
# Fused Pallas kernel
# ---------------------------------------------------------------------------
def _fused_graph_conv_kernel(slab_ref, emb_ref, f1_ref, w_ref, bias_ref, o_ref, *, n):
    # slab_ref: [R_PAD, V_PAD] bf16  rows 0..n-1     : normalized k-hop rows of `inputs`
    #                                rows n..n+nc-1  : rows of the (extended) candidates
    #                                remaining rows  : padding (sliced away by the wrapper).
    # emb_ref : [V_PAD, D_PAD] bf16  zero-padded embedding table.
    # f1_ref  : [D_PAD, D_PAD] bf16  row j (< n) = embed_table[inputs[j]], rest zero.
    # w_ref   : [D_PAD, D_PAD] bf16  weight at [:OUT, :IN], rest zero.
    # bias_ref: [8, D_PAD]     bf16  row 0 = bias at [:OUT], rest zero.
    # o_ref   : [R_PAD, D_PAD] f32   rows 0..n-1 : relu(f0 @ W + bias . f1[j])  (cols :IN valid)
    #                                rows n..    : candidate aggregation        (cols :D  valid)

    # One batched aggregation matmul for inputs + candidates (MXU, f32 accumulate).
    agg = jnp.dot(slab_ref[...], emb_ref[...],
                  preferred_element_type=jnp.float32)                 # [R_PAD, D_PAD] f32

    # features[0] @ weight on the full slab (candidate/pad rows masked out below).
    proj = jnp.dot(agg.astype(jnp.bfloat16), w_ref[...],
                   preferred_element_type=jnp.float32)                # [R_PAD, D_PAD] f32

    # torch: matmul(features[1], bias) -> [N], broadcast over the LAST axis of proj.
    # s[0, j] = sum_d bias[d] * f1[j, d]  (zero for j >= n)  -- row-broadcast term.
    s = lax.dot_general(bias_ref[...], f1_ref[...],
                        dimension_numbers=(((1,), (1,)), ((), ())),
                        preferred_element_type=jnp.float32)           # [8, D_PAD] f32

    # TODO(synk): dropout p=0.0 is identity; nonzero p would need pltpu.prng_*.
    feat = jnp.maximum(proj + s[0:1, :], 0.0)                         # relu, f32 epilogue

    # Single unmasked, lane-dense full-slab store.
    row = lax.broadcasted_iota(jnp.int32, o_ref.shape, 0)
    o_ref[...] = jnp.where(row < n, feat, agg)


def fused_graph_conv(slab, emb_pad, f1_pad, w_pad, bias_pad, *, n):
    r_pad, v_pad = slab.shape
    d_pad = emb_pad.shape[1]
    kernel = functools.partial(_fused_graph_conv_kernel, n=n)
    return pl.pallas_call(
        kernel,
        out_shape=jax.ShapeDtypeStruct((r_pad, d_pad), jnp.float32),
        grid=(1,),
        in_specs=[
            pl.BlockSpec((r_pad, v_pad), lambda i: (0, 0)),
            pl.BlockSpec((v_pad, d_pad), lambda i: (0, 0)),
            pl.BlockSpec((d_pad, d_pad), lambda i: (0, 0)),
            pl.BlockSpec((d_pad, d_pad), lambda i: (0, 0)),
            pl.BlockSpec((8, d_pad), lambda i: (0, 0)),
        ],
        out_specs=pl.BlockSpec((r_pad, d_pad), lambda i: (0, 0)),
        compiler_params=pltpu.CompilerParams(dimension_semantics=("arbitrary",)),
    )(slab, emb_pad, f1_pad, w_pad, bias_pad)


# ---------------------------------------------------------------------------
# Deterministic "GraphAggregator" pieces (glue)
# ---------------------------------------------------------------------------
def build_graph():
    """Ring graph with self loops over NUM_EMBED nodes, row-normalized,
    raised to the K_HOP power (mean k-hop aggregation).  Built ONCE."""
    v = NUM_EMBED
    idx = jnp.arange(v)
    a = jnp.zeros((v, v), jnp.float32)
    a = a.at[idx, idx].set(1.0)
    a = a.at[idx, (idx + 1) % v].set(1.0)
    a = a.at[idx, (idx - 1) % v].set(1.0)
    a = a / jnp.sum(a, axis=1, keepdims=True)
    m = a
    for _ in range(K_HOP - 1):
        m = m @ a
    return m  # [V, V]


def candidate_select(last_node):
    # 1-hop neighbors of the last input node in the ring graph (glue).
    v = NUM_EMBED
    return jnp.stack([(last_node - 1) % v, last_node, (last_node + 1) % v])


def prepare_params(adj_k, embed_table, weight, bias):
    """Lane-dense (128-wide) zero-padded bf16 MXU operands, built ONCE outside jit."""
    v, d = embed_table.shape
    out_f, in_f = weight.shape
    assert d == out_f, "embed_size must equal out_features for torch matmul(features, weight/bias)"
    assert v <= V_PAD and d <= D_PAD and in_f <= D_PAD and out_f <= D_PAD
    bf = jnp.bfloat16
    adj_k_pad = jnp.zeros((v, V_PAD), bf).at[:, :v].set(adj_k.astype(bf))          # [V, 128]
    emb_pad = jnp.zeros((V_PAD, D_PAD), bf).at[:v, :d].set(embed_table.astype(bf))  # [128, 128]
    w_pad = jnp.zeros((D_PAD, D_PAD), bf).at[:out_f, :in_f].set(weight.astype(bf))  # [128, 128]
    bias_pad = jnp.zeros((8, D_PAD), bf).at[0, :out_f].set(bias.astype(bf))         # [8, 128]
    return adj_k_pad, emb_pad, w_pad, bias_pad


# ---------------------------------------------------------------------------
# GraphConv forward (all per-call glue fused under jit, one pallas_call)
# ---------------------------------------------------------------------------
@jax.jit
def graph_conv_forward(inputs, candidates, adj_k_pad, emb_pad, w_pad, bias_pad):
    n = inputs.shape[0]
    assert n == IN_FEATURES, "len(inputs) must equal in_features for torch's sum(features) broadcast"
    assert n % 8 == 0 and n <= D_PAD

    # candidates.extend(candidate_select(graph, inputs[-1]))
    # NOTE: duplicates with existing candidates are kept (matches the module).
    new_cands = candidate_select(inputs[-1])
    all_cands = jnp.concatenate([candidates, new_cands], axis=0)
    nc = all_cands.shape[0]
    r_pad = ((n + nc + 7) // 8) * 8

    # Batched aggregation slab via ONE row gather from the pre-padded adjacency.
    # Padding rows reuse node 0 (harmless: their output rows are sliced away).
    idx = jnp.concatenate(
        [inputs, all_cands, jnp.zeros((r_pad - n - nc,), jnp.int32)], axis=0)
    slab = adj_k_pad[idx]                                     # [r_pad, V_PAD] bf16

    # get_embedding(inputs) == row gather; rows >= n stay zero so the bias
    # matmul's padded columns are zero.
    f1_pad = jnp.zeros((D_PAD, D_PAD), jnp.bfloat16).at[:n, :].set(emb_pad[inputs])

    out = fused_graph_conv(slab, emb_pad, f1_pad, w_pad, bias_pad, n=n)  # [r_pad, 128] f32

    features = out[:n, :IN_FEATURES]                          # relu(f0 @ W + f1 @ bias)  [n, in_f]
    cand_features = out[n:n + nc, :EMBED_SIZE]                # aggregated candidates     [nc, d]
    return features, cand_features


# ---------------------------------------------------------------------------
if __name__ == "__main__":
    key = jax.random.PRNGKey(0)
    k_emb, k_w, k_b, k_in, k_cand = jax.random.split(key, 5)

    # Parameters (deterministic, matching __init__ shapes).
    embed_table = jax.random.normal(k_emb, (NUM_EMBED, EMBED_SIZE), jnp.float32)
    weight = jax.random.normal(k_w, (OUT_FEATURES, IN_FEATURES), jnp.float32)
    bias = jax.random.normal(k_b, (OUT_FEATURES,), jnp.float32)

    # TODO(synk): original module pickle-loads `self.graph`; synthesized here.
    adj_k = build_graph()   # built once, never re-traced per forward

    # Padded / bf16 MXU operands, built once outside the jitted forward.
    adj_k_pad, emb_pad, w_pad, bias_pad = prepare_params(adj_k, embed_table, weight, bias)

    # Inputs: node ids.
    inputs = jax.random.randint(k_in, (N_INPUTS,), 0, NUM_EMBED, jnp.int32)
    candidates = jax.random.randint(k_cand, (N_CAND0,), 0, NUM_EMBED, jnp.int32)

    features, cand_features = graph_conv_forward(
        inputs, candidates, adj_k_pad, emb_pad, w_pad, bias_pad)
    jax.block_until_ready((features, cand_features))

    # Pure-f32 jnp reference of the torch semantics (kernel uses bf16 MXU inputs,
    # so compare with a loose tolerance).
    new_cands = candidate_select(inputs[-1])
    all_cands = jnp.concatenate([candidates, new_cands], axis=0)
    f0_ref = adj_k[inputs] @ embed_table
    f1_ref = embed_table[inputs]
    feat_ref = jnp.maximum(f0_ref @ weight + (f1_ref @ bias)[None, :], 0.0)
    cand_ref = adj_k[all_cands] @ embed_table

    assert features.shape == (N_INPUTS, IN_FEATURES)
    assert cand_features.shape == (N_CAND0 + 3, EMBED_SIZE)
    assert bool(jnp.all(features >= 0.0))                     # relu
    assert bool(jnp.all(jnp.isfinite(features))) and bool(jnp.all(jnp.isfinite(cand_features)))
    assert bool(jnp.allclose(features, feat_ref, rtol=1e-1, atol=1.5e-1))
    assert bool(jnp.allclose(cand_features, cand_ref, rtol=1e-1, atol=1.5e-1))
    print("KERNEL_OK")
</pallas_src>

<mosaic_0001>
module attributes {stable_mosaic.version = 11 : i64} {
  func.func @_fused_graph_conv_kernel(%arg0: i32, %arg1: memref<32x128xbf16, #tpu.memory_space<vmem>>, %arg2: memref<128x128xbf16, #tpu.memory_space<vmem>>, %arg3: memref<128x128xbf16, #tpu.memory_space<vmem>>, %arg4: memref<128x128xbf16, #tpu.memory_space<vmem>>, %arg5: memref<8x128xbf16, #tpu.memory_space<vmem>>, %arg6: memref<32x128xf32, #tpu.memory_space<vmem>>) attributes {dimension_semantics = [#tpu.dimension_semantics<arbitrary>], iteration_bounds = array<i64: 1>, scalar_prefetch = 0 : i64, scratch_operands = 0 : i64, tpu.core_type = #tpu.core_type<tc>, window_params = [{pipeline_mode = #tpu.pipeline_mode<synchronous>, transform_indices = @transform_0, window_bounds = array<i64: 32, 128>}, {pipeline_mode = #tpu.pipeline_mode<synchronous>, transform_indices = @transform_1, window_bounds = array<i64: 128, 128>}, {pipeline_mode = #tpu.pipeline_mode<synchronous>, transform_indices = @transform_2, window_bounds = array<i64: 128, 128>}, {pipeline_mode = #tpu.pipeline_mode<synchronous>, transform_indices = @transform_3, window_bounds = array<i64: 128, 128>}, {pipeline_mode = #tpu.pipeline_mode<synchronous>, transform_indices = @transform_4, window_bounds = array<i64: 8, 128>}, {pipeline_mode = #tpu.pipeline_mode<synchronous>, transform_indices = @transform_5, window_bounds = array<i64: 32, 128>}]} {
    %c0 = arith.constant 0 : index
    %c0_0 = arith.constant 0 : index
    %0 = vector.load %arg1[%c0, %c0_0] : memref<32x128xbf16, #tpu.memory_space<vmem>>, vector<32x128xbf16>
    %c0_1 = arith.constant 0 : index
    %c0_2 = arith.constant 0 : index
    %1 = vector.load %arg2[%c0_1, %c0_2] : memref<128x128xbf16, #tpu.memory_space<vmem>>, vector<128x128xbf16>
    %cst = arith.constant dense<0.000000e+00> : vector<32x128xf32>
    %2 = tpu.matmul %0, %1, %cst {dimension_numbers = #tpu.dot_dimension_numbers<[1], [0], [0], [1], [0, 0, 1, 1], [], []>} : vector<32x128xbf16>, vector<128x128xbf16>, vector<32x128xf32> -> vector<32x128xf32>
    %3 = arith.truncf %2 : vector<32x128xf32> to vector<32x128xbf16>
    %c0_3 = arith.constant 0 : index
    %c0_4 = arith.constant 0 : index
    %4 = vector.load %arg4[%c0_3, %c0_4] : memref<128x128xbf16, #tpu.memory_space<vmem>>, vector<128x128xbf16>
    %cst_5 = arith.constant dense<0.000000e+00> : vector<32x128xf32>
    %5 = tpu.matmul %3, %4, %cst_5 {dimension_numbers = #tpu.dot_dimension_numbers<[1], [0], [0], [1], [0, 0, 1, 1], [], []>} : vector<32x128xbf16>, vector<128x128xbf16>, vector<32x128xf32> -> vector<32x128xf32>
    %c0_6 = arith.constant 0 : index
    %c0_7 = arith.constant 0 : index
    %6 = vector.load %arg5[%c0_6, %c0_7] : memref<8x128xbf16, #tpu.memory_space<vmem>>, vector<8x128xbf16>
    %c0_8 = arith.constant 0 : index
    %c0_9 = arith.constant 0 : index
    %7 = vector.load %arg3[%c0_8, %c0_9] : memref<128x128xbf16, #tpu.memory_space<vmem>>, vector<128x128xbf16>
    %cst_10 = arith.constant dense<0.000000e+00> : vector<8x128xf32>
    %8 = tpu.matmul %6, %7, %cst_10 {dimension_numbers = #tpu.dot_dimension_numbers<[1], [1], [0], [0], [0, 0, 1, 0], [], []>} : vector<8x128xbf16>, vector<128x128xbf16>, vector<8x128xf32> -> vector<8x128xf32>
    %9 = vector.extract_strided_slice %8 {offsets = [0, 0], sizes = [1, 128], strides = [1, 1]} : vector<8x128xf32> to vector<1x128xf32>
    %10 = vector.broadcast %9 : vector<1x128xf32> to vector<32x128xf32>
    %11 = arith.addf %5, %10 : vector<32x128xf32>
    %cst_11 = arith.constant 0.000000e+00 : f32
    %12 = vector.broadcast %cst_11 : f32 to vector<32x128xf32>
    %13 = arith.maximumf %11, %12 : vector<32x128xf32>
    %14 = tpu.iota {dimensions = array<i32: 0>} : vector<32x128xi32>
    %c16_i32 = arith.constant 16 : i32
    %15 = vector.broadcast %c16_i32 : i32 to vector<32x128xi32>
    %16 = arith.cmpi slt, %14, %15 : vector<32x128xi32>
    %17 = arith.select %16, %13, %2 : vector<32x128xi1>, vector<32x128xf32>
    %c0_12 = arith.constant 0 : index
    %c0_13 = arith.constant 0 : index
    %18 = vector.load %arg6[%c0_12, %c0_13] : memref<32x128xf32, #tpu.memory_space<vmem>>, vector<32x128xf32>
    tpu.vector_store %arg6[%c0_12, %c0_13], %17 {strides = array<i32>} : memref<32x128xf32, #tpu.memory_space<vmem>>, vector<32x128xf32>,
    return
  }
  func.func @transform_0(%arg0: i32) -> (i32, i32) {
    %c0_i32 = arith.constant 0 : i32
    %c0_i32_0 = arith.constant 0 : i32
    %c0_i32_1 = arith.constant 0 : i32
    return %c0_i32, %c0_i32_0 : i32, i32
  }
  func.func @transform_1(%arg0: i32) -> (i32, i32) {
    %c0_i32 = arith.constant 0 : i32
    %c0_i32_0 = arith.constant 0 : i32
    %c0_i32_1 = arith.constant 0 : i32
    return %c0_i32, %c0_i32_0 : i32, i32
  }
  func.func @transform_2(%arg0: i32) -> (i32, i32) {
    %c0_i32 = arith.constant 0 : i32
    %c0_i32_0 = arith.constant 0 : i32
    %c0_i32_1 = arith.constant 0 : i32
    return %c0_i32, %c0_i32_0 : i32, i32
  }
  func.func @transform_3(%arg0: i32) -> (i32, i32) {
    %c0_i32 = arith.constant 0 : i32
    %c0_i32_0 = arith.constant 0 : i32
    %c0_i32_1 = arith.constant 0 : i32
    return %c0_i32, %c0_i32_0 : i32, i32
  }
  func.func @transform_4(%arg0: i32) -> (i32, i32) {
    %c0_i32 = arith.constant 0 : i32
    %c0_i32_0 = arith.constant 0 : i32
    %c0_i32_1 = arith.constant 0 : i32
    return %c0_i32, %c0_i32_0 : i32, i32
  }
  func.func @transform_5(%arg0: i32) -> (i32, i32) {
    %c0_i32 = arith.constant 0 : i32
    %c0_i32_0 = arith.constant 0 : i32
    %c0_i32_1 = arith.constant 0 : i32
    return %c0_i32, %c0_i32_0 : i32, i32
  }
}

</mosaic_0001>

<llo_original>
// kernel: graph_conv_forward.1
$region0: #{graph_conv_forward.1}
  #allocation0 [shape = 'u32[]', space=smem, size = 0x4, offset = 0x4, fixed_abs, tag = 'smem constant byte address 0x4 - core index']
  #allocation1 [shape = 'u32[144,128]{1,0:T(1,128)}', space=vmem, size = 0x12000, scoped, tag = 'internal scratch']
  %s0 = inlined_call_operand.vmem [shape: bf16[32,128], index: 0, kind: input, shape index: {}]
  %s1 = inlined_call_operand.vmem [shape: bf16[128,128], index: 1, kind: input, shape index: {}]
  %s2 = inlined_call_operand.vmem [shape: bf16[128,128], index: 2, kind: input, shape index: {}]
  %s3 = inlined_call_operand.vmem [shape: bf16[128,128], index: 3, kind: input, shape index: {}]
  %s4 = inlined_call_operand.vmem [shape: bf16[8,128], index: 4, kind: input, shape index: {}]
  %s5 = inlined_call_operand.vmem [shape: f32[32,128], index: 5, kind: output, shape index: {}]
  %s6 = sld [smem:[#allocation0]]
  $region30: #{graph_conv_forward.1} parent=0
    _
  %s8 = ssub.s32 1, %s6
  %s9 = scalar_select 0, %s8, %s6
  // Predicated region
  $region2: #{graph_conv_forward.1} parent=0 // pred_check
    _
  $region3: #{graph_conv_forward.1} parent=0 // pred_check_branch
    %11 = sbr.rel (0) target = $region5
  $region4: #{graph_conv_forward.1} parent=0 // pred_region
    _
  $region5: #{graph_conv_forward.1} parent=0 // pred_fallthru
    _
  // Predicated region
  $region6: #{graph_conv_forward.1} parent=0 // pred_check
    _
  $region7: #{graph_conv_forward.1} parent=0 // pred_check_branch
    %13 = sbr.rel (0) target = $region9
  $region8: #{graph_conv_forward.1} parent=0 // pred_region
    _
  $region9: #{graph_conv_forward.1} parent=0 // pred_fallthru
    _
  // Predicated region
  $region10: #{graph_conv_forward.1} parent=0 // pred_check
    _
  $region11: #{graph_conv_forward.1} parent=0 // pred_check_branch
    %15 = sbr.rel (0) target = $region13
  $region12: #{graph_conv_forward.1} parent=0 // pred_region
    _
  $region13: #{graph_conv_forward.1} parent=0 // pred_fallthru
    _
  // Predicated region
  $region14: #{graph_conv_forward.1} parent=0 // pred_check
    _
  $region15: #{graph_conv_forward.1} parent=0 // pred_check_branch
    %17 = sbr.rel (0) target = $region17
  $region16: #{graph_conv_forward.1} parent=0 // pred_region
    _
  $region17: #{graph_conv_forward.1} parent=0 // pred_fallthru
    _
  // Predicated region
  $region18: #{graph_conv_forward.1} parent=0 // pred_check
    _
  $region19: #{graph_conv_forward.1} parent=0 // pred_check_branch
    %19 = sbr.rel (0) target = $region21
  $region20: #{graph_conv_forward.1} parent=0 // pred_region
    _
  $region21: #{graph_conv_forward.1} parent=0 // pred_fallthru
    _
  %v21 = vld [vmem:[%s0] sm:$0xf]
  %v22 = vld [vmem:[%s0 + $0x4] sm:$0xf]
  %v23 = vld [vmem:[%s0 + $0x8] sm:$0xf]
  %v24 = vld [vmem:[%s0 + $0xc] sm:$0xf]
  %v25 = vld [vmem:[%s1] sm:$0xf]
  %v26 = vld [vmem:[%s1 + $0x4] sm:$0xf]
  %v27 = vld [vmem:[%s1 + $0x8] sm:$0xf]
  %v28 = vld [vmem:[%s1 + $0xc] sm:$0xf]
  %v29 = vld [vmem:[%s1 + $0x10] sm:$0xf]
  %v30 = vld [vmem:[%s1 + $0x14] sm:$0xf]
  %v31 = vld [vmem:[%s1 + $0x18] sm:$0xf]
  %v32 = vld [vmem:[%s1 + $0x1c] sm:$0xf]
  %v33 = vld [vmem:[%s1 + $0x20] sm:$0xf]
  %v34 = vld [vmem:[%s1 + $0x24] sm:$0xf]
  %v35 = vld [vmem:[%s1 + $0x28] sm:$0xf]
  %v36 = vld [vmem:[%s1 + $0x2c] sm:$0xf]
  %v37 = vld [vmem:[%s1 + $0x30] sm:$0xf]
  %v38 = vld [vmem:[%s1 + $0x34] sm:$0xf]
  %v39 = vld [vmem:[%s1 + $0x38] sm:$0xf]
  %v40 = vld [vmem:[%s1 + $0x3c] sm:$0xf]
  %v45 = vunpack.c.l.b16 %v21
  %v46 = vunpack.c.l.b16 %v22
  %v47 = vunpack.c.l.b16 %v23
  %v48 = vunpack.c.l.b16 %v24
  %v49 = vpack.c.b16 %v46, %v45
  %v50 = vpack.c.b16 %v48, %v47
  %v69 = vunpack.c.l.b16 %v25
  %v70 = vunpack.c.l.b16 %v26
  %v71 = vunpack.c.l.b16 %v27
  %v72 = vunpack.c.l.b16 %v28
  %v73 = vunpack.c.l.b16 %v29
  %v74 = vunpack.c.l.b16 %v30
  %v75 = vunpack.c.l.b16 %v31
  %v76 = vunpack.c.l.b16 %v32
  %v77 = vunpack.c.l.b16 %v33
  %v78 = vunpack.c.l.b16 %v34
  %v79 = vunpack.c.l.b16 %v35
  %v80 = vunpack.c.l.b16 %v36
  %v81 = vunpack.c.l.b16 %v37
  %v82 = vunpack.c.l.b16 %v38
  %v83 = vunpack.c.l.b16 %v39
  %v84 = vunpack.c.l.b16 %v40
  %v85 = vpack.c.b16 %v70, %v69
  %v86 = vpack.c.b16 %v72, %v71
  %v87 = vpack.c.b16 %v74, %v73
  %v88 = vpack.c.b16 %v76, %v75
  %v89 = vpack.c.b16 %v78, %v77
  %v90 = vpack.c.b16 %v80, %v79
  %v91 = vpack.c.b16 %v82, %v81
  %v92 = vpack.c.b16 %v84, %v83
  %101 = vmatprep.subr.bf16.mxu0 0
  %102 = vmatpush1.bf16.msra.mxu0 %v85
  %103 = vmatprep.subr.bf16.mxu0 0
  %104 = vmatpush1.bf16.msra.mxu0 %v86
  %105 = vmatprep.subr.bf16.mxu0 0
  %106 = vmatpush1.bf16.msra.mxu0 %v87
  %107 = vmatprep.subr.bf16.mxu0 0
  %108 = vmatpush1.bf16.msra.mxu0 %v88
  %109 = vmatprep.subr.bf16.mxu0 0
  %110 = vmatpush1.bf16.msra.mxu0 %v89
  %111 = vmatprep.subr.bf16.mxu0 0
  %112 = vmatpush1.bf16.msra.mxu0 %v90
  %113 = vmatprep.subr.bf16.mxu0 0
  %114 = vmatpush1.bf16.msra.mxu0 %v91
  %115 = vmatprep.subr.bf16.mxu0 0
  %116 = vmatpush1.bf16.msra.mxu0 %v92
  %117 = vmatprep.subr.bf16.mxu0 0
  %118 = vmatpush1.bf16.msra.mxu0 0
  %119 = vmatprep.subr.bf16.mxu0 0
  %120 = vmatpush1.bf16.msra.mxu0 0
  %121 = vmatprep.subr.bf16.mxu0 0
  %122 = vmatpush1.bf16.msra.mxu0 0
  %123 = vmatprep.subr.bf16.mxu0 0
  %124 = vmatpush1.bf16.msra.mxu0 0
  %125 = vmatprep.subr.bf16.mxu0 0
  %126 = vmatpush1.bf16.msra.mxu0 0
  %127 = vmatprep.subr.bf16.mxu0 0
  %128 = vmatpush1.bf16.msra.mxu0 0
  %129 = vmatprep.subr.bf16.mxu0 0
  %130 = vmatpush1.bf16.msra.mxu0 0
  %131 = vmatprep.subr.bf16.mxu0 0
  %132 = vmatpush1.bf16.msra.mxu0 0
  %133 = vmatprep.mubr.bf16.mxu0 0
  %134 = vmatmul.mubr.bf16.gmra.mrb[0].mxu0 %v49
  %v135 = vpop.f32.mrb[0].mxu0
  %v136 = vadd.f32 0.0, %v135
  %v137 = vpop.f32.mrb[0].mxu0
  %v138 = vpop.f32.mrb[0].mxu0
  %v139 = vadd.f32 0.0, %v138
  %v140 = vpop.f32.mrb[0].mxu0
  %141 = vmatprep.mubr.bf16.mxu0 0
  %142 = vmatmul.mubr.bf16.gmra.mrb[0].mxu0 %v50
  %v143 = vpop.f32.mrb[0].mxu0
  %v144 = vadd.f32 0.0, %v143
  %v145 = vpop.f32.mrb[0].mxu0
  %v146 = vpop.f32.mrb[0].mxu0
  %v147 = vadd.f32 0.0, %v146
  %v148 = vpop.f32.mrb[0].mxu0
  %149 = vdwg.mxu0
  %v150 = vpack.c.bf16 %v139, %v136
  %v151 = vpack.c.bf16 %v147, %v144
  %v152 = vld [vmem:[%s3] sm:$0xf]
  %v153 = vld [vmem:[%s3 + $0x4] sm:$0xf]
  %v154 = vld [vmem:[%s3 + $0x8] sm:$0xf]
  %v155 = vld [vmem:[%s3 + $0xc] sm:$0xf]
  %v156 = vld [vmem:[%s3 + $0x10] sm:$0xf]
  %v157 = vld [vmem:[%s3 + $0x14] sm:$0xf]
  %v158 = vld [vmem:[%s3 + $0x18] sm:$0xf]
  %v159 = vld [vmem:[%s3 + $0x1c] sm:$0xf]
  %v160 = vld [vmem:[%s3 + $0x20] sm:$0xf]
  %v161 = vld [vmem:[%s3 + $0x24] sm:$0xf]
  %v162 = vld [vmem:[%s3 + $0x28] sm:$0xf]
  %v163 = vld [vmem:[%s3 + $0x2c] sm:$0xf]
  %v164 = vld [vmem:[%s3 + $0x30] sm:$0xf]
  %v165 = vld [vmem:[%s3 + $0x34] sm:$0xf]
  %v166 = vld [vmem:[%s3 + $0x38] sm:$0xf]
  %v167 = vld [vmem:[%s3 + $0x3c] sm:$0xf]
  %v168 = vld [vmem:[%s4] sm:$0xf]
  %v169 = vld [vmem:[%s2] sm:$0xf]
  %v170 = vld [vmem:[%s2 + $0x4] sm:$0xf]
  %v171 = vld [vmem:[%s2 + $0x8] sm:$0xf]
  %v172 = vld [vmem:[%s2 + $0xc] sm:$0xf]
  %v173 = vld [vmem:[%s2 + $0x10] sm:$0xf]
  %v174 = vld [vmem:[%s2 + $0x14] sm:$0xf]
  %v175 = vld [vmem:[%s2 + $0x18] sm:$0xf]
  %v176 = vld [vmem:[%s2 + $0x1c] sm:$0xf]
  %v177 = vld [vmem:[%s2 + $0x20] sm:$0xf]
  %v178 = vld [vmem:[%s2 + $0x24] sm:$0xf]
  %v179 = vld [vmem:[%s2 + $0x28] sm:$0xf]
  %v180 = vld [vmem:[%s2 + $0x2c] sm:$0xf]
  %v181 = vld [vmem:[%s2 + $0x30] sm:$0xf]
  %v182 = vld [vmem:[%s2 + $0x34] sm:$0xf]
  %v183 = vld [vmem:[%s2 + $0x38] sm:$0xf]
  %v184 = vld [vmem:[%s2 + $0x3c] sm:$0xf]
  %v201 = vunpack.c.l.b16 %v169
  %v202 = vunpack.c.l.b16 %v170
  %v203 = vunpack.c.l.b16 %v171
  %v204 = vunpack.c.l.b16 %v172
  %v205 = vunpack.c.l.b16 %v173
  %v206 = vunpack.c.l.b16 %v174
  %v207 = vunpack.c.l.b16 %v175
  %v208 = vunpack.c.l.b16 %v176
  %v209 = vunpack.c.l.b16 %v177
  %v210 = vunpack.c.l.b16 %v178
  %v211 = vunpack.c.l.b16 %v179
  %v212 = vunpack.c.l.b16 %v180
  %v213 = vunpack.c.l.b16 %v181
  %v214 = vunpack.c.l.b16 %v182
  %v215 = vunpack.c.l.b16 %v183
  %v216 = vunpack.c.l.b16 %v184
  %v217 = vpack.c.b16 %v202, %v201
  %v218 = vpack.c.b16 %v204, %v203
  %v219 = vpack.c.b16 %v206, %v205
  %v220 = vpack.c.b16 %v208, %v207
  %v221 = vpack.c.b16 %v210, %v209
  %v222 = vpack.c.b16 %v212, %v211
  %v223 = vpack.c.b16 %v214, %v213
  %v224 = vpack.c.b16 %v216, %v215
  %233 = vmatprep.subr.bf16.mxu0 0
  %234 = vmatpush1.bf16.xpose.msra.mxu0 %v217
  %235 = vmatprep.subr.bf16.mxu0 0
  %236 = vmatpush1.bf16.xpose.msra.mxu0 %v218
  %237 = vmatprep.subr.bf16.mxu0 0
  %238 = vmatpush1.bf16.xpose.msra.mxu0 %v219
  %239 = vmatprep.subr.bf16.mxu0 0
  %240 = vmatpush1.bf16.xpose.msra.mxu0 %v220
  %241 = vmatprep.subr.bf16.mxu0 0
  %242 = vmatpush1.bf16.xpose.msra.mxu0 %v221
  %243 = vmatprep.subr.bf16.mxu0 0
  %244 = vmatpush1.bf16.xpose.msra.mxu0 %v222
  %245 = vmatprep.subr.bf16.mxu0 0
  %246 = vmatpush1.bf16.xpose.msra.mxu0 %v223
  %247 = vmatprep.subr.bf16.mxu0 0
  %248 = vmatpush1.bf16.xpose.msra.mxu0 %v224
  %249 = vmatprep.subr.bf16.mxu0 0
  %250 = vmatpush1.bf16.xpose.msra.mxu0 0
  %251 = vmatprep.subr.bf16.mxu0 0
  %252 = vmatpush1.bf16.xpose.msra.mxu0 0
  %253 = vmatprep.subr.bf16.mxu0 0
  %254 = vmatpush1.bf16.xpose.msra.mxu0 0
  %255 = vmatprep.subr.bf16.mxu0 0
  %256 = vmatpush1.bf16.xpose.msra.mxu0 0
  %257 = vmatprep.subr.bf16.mxu0 0
  %258 = vmatpush1.bf16.xpose.msra.mxu0 0
  %259 = vmatprep.subr.bf16.mxu0 0
  %260 = vmatpush1.bf16.xpose.msra.mxu0 0
  %261 = vmatprep.subr.bf16.mxu0 0
  %262 = vmatpush1.bf16.xpose.msra.mxu0 0
  %263 = vmatprep.subr.bf16.mxu0 0
  %264 = vmatpush1.bf16.xpose.msra.mxu0 0
  %265 = vmatprep.mubr.bf16.mxu0 0
  %266 = vmatmul.mubr.bf16.gmra.mrb[0].mxu0 %v168
  %v267 = vpop.f32.mrb[0].mxu0
  %v268 = vadd.f32 0.0, %v267
  %v269 = vpop.f32.mrb[0].mxu0
  %v270 = vpop.f32.mrb[0].mxu0
  %v271 = vpop.f32.mrb[0].mxu0
  %272 = vdwg.mxu0
  %v273 = vlaneseq
  %v274 = vshrl.u32 %v273, 7
  %v275 = vsub.s32 0, %v274
  %v276 = vrot.slane %v268, %v275
  %v293 = vunpack.c.l.b16 %v152
  %v294 = vunpack.c.l.b16 %v153
  %v295 = vunpack.c.l.b16 %v154
  %v296 = vunpack.c.l.b16 %v155
  %v297 = vunpack.c.l.b16 %v156
  %v298 = vunpack.c.l.b16 %v157
  %v299 = vunpack.c.l.b16 %v158
  %v300 = vunpack.c.l.b16 %v159
  %v301 = vunpack.c.l.b16 %v160
  %v302 = vunpack.c.l.b16 %v161
  %v303 = vunpack.c.l.b16 %v162
  %v304 = vunpack.c.l.b16 %v163
  %v305 = vunpack.c.l.b16 %v164
  %v306 = vunpack.c.l.b16 %v165
  %v307 = vunpack.c.l.b16 %v166
  %v308 = vunpack.c.l.b16 %v167
  %v309 = vpack.c.b16 %v294, %v293
  %v310 = vpack.c.b16 %v296, %v295
  %v311 = vpack.c.b16 %v298, %v297
  %v312 = vpack.c.b16 %v300, %v299
  %v313 = vpack.c.b16 %v302, %v301
  %v314 = vpack.c.b16 %v304, %v303
  %v315 = vpack.c.b16 %v306, %v305
  %v316 = vpack.c.b16 %v308, %v307
  %325 = vmatprep.subr.bf16.mxu0 0
  %326 = vmatpush1.bf16.msra.mxu0 %v309
  %327 = vmatprep.subr.bf16.mxu0 0
  %328 = vmatpush1.bf16.msra.mxu0 %v310
  %329 = vmatprep.subr.bf16.mxu0 0
  %330 = vmatpush1.bf16.msra.mxu0 %v311
  %331 = vmatprep.subr.bf16.mxu0 0
  %332 = vmatpush1.bf16.msra.mxu0 %v312
  %333 = vmatprep.subr.bf16.mxu0 0
  %334 = vmatpush1.bf16.msra.mxu0 %v313
  %335 = vmatprep.subr.bf16.mxu0 0
  %336 = vmatpush1.bf16.msra.mxu0 %v314
  %337 = vmatprep.subr.bf16.mxu0 0
  %338 = vmatpush1.bf16.msra.mxu0 %v315
  %339 = vmatprep.subr.bf16.mxu0 0
  %340 = vmatpush1.bf16.msra.mxu0 %v316
  %341 = vmatprep.subr.bf16.mxu0 0
  %342 = vmatpush1.bf16.msra.mxu0 0
  %343 = vmatprep.subr.bf16.mxu0 0
  %344 = vmatpush1.bf16.msra.mxu0 0
  %345 = vmatprep.subr.bf16.mxu0 0
  %346 = vmatpush1.bf16.msra.mxu0 0
  %347 = vmatprep.subr.bf16.mxu0 0
  %348 = vmatpush1.bf16.msra.mxu0 0
  %349 = vmatprep.subr.bf16.mxu0 0
  %350 = vmatpush1.bf16.msra.mxu0 0
  %351 = vmatprep.subr.bf16.mxu0 0
  %352 = vmatpush1.bf16.msra.mxu0 0
  %353 = vmatprep.subr.bf16.mxu0 0
  %354 = vmatpush1.bf16.msra.mxu0 0
  %355 = vmatprep.subr.bf16.mxu0 0
  %356 = vmatpush1.bf16.msra.mxu0 0
  %357 = vmatprep.mubr.bf16.mxu0 0
  %358 = vmatmul.mubr.bf16.gmra.mrb[0].mxu0 %v150
  %v359 = vpop.f32.mrb[0].mxu0
  %v360 = vadd.f32 %v276, %v359
  %v361 = vpop.f32.mrb[0].mxu0
  %v362 = vpop.f32.mrb[0].mxu0
  %v363 = vadd.f32 %v276, %v362
  %v364 = vpop.f32.mrb[0].mxu0
  %365 = vmatprep.mubr.bf16.mxu0 0
  %366 = vmatmul.mubr.bf16.gmra.mrb[0].mxu0 %v151
  %v367 = vpop.f32.mrb[0].mxu0
  %v368 = vadd.f32 %v276, %v367
  %v369 = vpop.f32.mrb[0].mxu0
  %v370 = vpop.f32.mrb[0].mxu0
  %v371 = vadd.f32 %v276, %v370
  %v372 = vpop.f32.mrb[0].mxu0
  %373 = vdwg.mxu0
  %v374 = vmax.f32 %v360, 0.0
  %v375 = vmax.f32 %v363, 0.0
  %v376 = vmax.f32 %v368, 0.0
  %v377 = vmax.f32 %v371, 0.0
  %v378 = vlaneseq
  %v379 = vshrl.u32 %v378, 7
  %v380 = vadd.s32 %v379, 8
  %v381 = vadd.s32 %v379, 16
  %v382 = vadd.s32 %v379, 24
  %vm383 = vcmp.lt.s32.totalorder %v379, 16
  %vm384 = vcmp.lt.s32.totalorder %v380, 16
  %vm385 = vcmp.lt.s32.totalorder %v381, 16
  %vm386 = vcmp.lt.s32.totalorder %v382, 16
  %v387 = vsel %vm383, %v374, %v136
  %v388 = vsel %vm384, %v375, %v139
  %v389 = vsel %vm385, %v376, %v144
  %v390 = vsel %vm386, %v377, %v147
  %391 = vst [vmem:[%s5] sm:$0xff] %v387
  %392 = vst [vmem:[%s5 + $0x8] sm:$0xff] %v388
  %393 = vst [vmem:[%s5 + $0x10] sm:$0xff] %v389
  %394 = vst [vmem:[%s5 + $0x18] sm:$0xff] %v390
  // Predicated region
  $region22: #{graph_conv_forward.1} parent=0 // pred_check
    _
  $region23: #{graph_conv_forward.1} parent=0 // pred_check_branch
    %396 = sbr.rel (0) target = $region25
  $region24: #{graph_conv_forward.1} parent=0 // pred_region
    _
  $region25: #{graph_conv_forward.1} parent=0 // pred_fallthru
    _
  // Predicated region
  $region26: #{graph_conv_forward.1} parent=0 // pred_check
    _
  $region27: #{graph_conv_forward.1} parent=0 // pred_check_branch
    %398 = sbr.rel (0) target = $region29
  $region28: #{graph_conv_forward.1} parent=0 // pred_region
    _
  $region29: #{graph_conv_forward.1} parent=0 // pred_fallthru
    _

</llo_original>
